<compile_context>
chip_gen: v5e
topology: v5e:2x2
jax: 0.10.0
libtpu: 0.0.40
codegen_flags: <defaults>
</compile_context>

<pallas_src>
import math

import jax
import jax.numpy as jnp
from jax.experimental import pallas as pl
from jax.experimental.pallas import tpu as pltpu


def _self_attn_body(h_ref, a_ref, b_ref, mask_ref, o_ref, attn_ref):
    TB, L, D = h_ref.shape
    Da = a_ref.shape[1]

    h = h_ref[...].astype(jnp.float32)                       # (TB, L, D)
    a = a_ref[...]                                           # (D, Da)
    b = b_ref[...]                                           # (1, Da) row vector

    # Projection: one large MXU matmul over all TB*L rows.
    ha = jnp.dot(h.reshape(TB * L, D), a,
                 preferred_element_type=jnp.float32)         # (TB*L, Da)
    ha = jnp.tanh(ha).reshape(TB, L, Da)                     # (TB, L, Da)

    # Width-1 projection (· b) as a VPU multiply + lane reduce (no N=1 matmul).
    e = jnp.sum(ha * b, axis=-1)                             # (TB, L)

    # Additive mask bias, built in-kernel (mirrors the PyTorch formula).
    if mask_ref is not None:
        m = mask_ref[...].astype(jnp.float32)                # (TB, L)
        full_mask = -1e30 * (1.0 - m)                        # -1e30 where mask==0
        n_false = jnp.sum(jnp.where(m == 0.0, 1.0, 0.0),
                          axis=-1, keepdims=True)            # (TB, 1)
        batch_mask = jnp.where(n_false > 0.0, 1.0, 0.0)      # (TB, 1)
        e = e + full_mask * batch_mask

    # Lane-major softmax over the sequence axis.
    e_max = jnp.max(e, axis=-1, keepdims=True)               # (TB, 1)
    p = jnp.exp(e - e_max)                                   # (TB, L)
    denom = jnp.sum(p, axis=-1, keepdims=True)               # (TB, 1)
    attn = p / denom                                         # (TB, L)

    # Attention pooling: broadcast-multiply + sublane reduce (no M=1 matmul).
    pooled = jnp.sum(h * attn[:, :, None], axis=1)           # (TB, D)

    o_ref[...] = pooled.astype(o_ref.dtype)
    attn_ref[...] = attn.astype(attn_ref.dtype)


def _masked_kernel(h_ref, a_ref, b_ref, mask_ref, o_ref, attn_ref):
    _self_attn_body(h_ref, a_ref, b_ref, mask_ref, o_ref, attn_ref)


def _unmasked_kernel(h_ref, a_ref, b_ref, o_ref, attn_ref):
    _self_attn_body(h_ref, a_ref, b_ref, None, o_ref, attn_ref)


def _choose_batch_tile(B, L, D, itemsize):
    """Pick TB (multiple of 8): big DMAs, but comfortably under v7x's 64 MiB VMEM."""
    budget = 16 * 1024 * 1024                 # double-buffered h blocks <= ~16 MiB
    per_row = max(1, 2 * L * D * itemsize)
    fit = max(8, budget // per_row)
    b_pad8 = ((B + 7) // 8) * 8
    tb = 8
    for cand in (32, 16, 8):
        if cand <= fit and cand <= b_pad8:
            tb = cand
            break
    # Prefer >= 2 grid steps when the batch allows, so v7x can use both cores.
    while tb > 8 and b_pad8 // tb < 2:
        tb //= 2
    return tb


def self_attentive_encoder(h, a, b, mask=None, return_logits=False):
    """JAX/Pallas equivalent of SelfAttentiveEncoder.forward.

    h: (B, L, D); a: (D, Da); b: (Da, 1); mask: optional (B, L) (0/1 or bool).
    Returns (B, D) pooled vectors (and (B, L) attention if return_logits).
    """
    B, L, D = h.shape
    Da = a.shape[1]
    itemsize = jnp.dtype(h.dtype).itemsize

    TB = _choose_batch_tile(B, L, D, itemsize)
    B_pad = ((B + TB - 1) // TB) * TB

    h_in = h if B_pad == B else jnp.pad(h, ((0, B_pad - B), (0, 0), (0, 0)))
    a_in = a.astype(jnp.float32)
    b_row = jnp.reshape(b, (1, Da)).astype(jnp.float32)

    in_specs = [
        pl.BlockSpec((TB, L, D), lambda i: (i, 0, 0)),       # h: per batch tile
        pl.BlockSpec((D, Da), lambda i: (0, 0)),             # a: resident
        pl.BlockSpec((1, Da), lambda i: (0, 0)),             # b: resident
    ]
    args = [h_in, a_in, b_row]

    if mask is not None:
        mask_f = mask.astype(jnp.float32)
        if B_pad != B:
            # Padded rows marked all-"True" -> zero bias, harmless (sliced off).
            mask_f = jnp.pad(mask_f, ((0, B_pad - B), (0, 0)), constant_values=1.0)
        in_specs.append(pl.BlockSpec((TB, L), lambda i: (i, 0)))
        args.append(mask_f)
        kernel = _masked_kernel
    else:
        kernel = _unmasked_kernel

    out, attn = pl.pallas_call(
        kernel,
        out_shape=(
            jax.ShapeDtypeStruct((B_pad, D), h.dtype),
            jax.ShapeDtypeStruct((B_pad, L), jnp.float32),
        ),
        grid_spec=pltpu.PrefetchScalarGridSpec(
            num_scalar_prefetch=0,
            grid=(B_pad // TB,),
            in_specs=in_specs,
            out_specs=[
                pl.BlockSpec((TB, D), lambda i: (i, 0)),
                pl.BlockSpec((TB, L), lambda i: (i, 0)),
            ],
        ),
        compiler_params=pltpu.CompilerParams(
            dimension_semantics=("parallel",)),
    )(*args)

    out = out[:B]
    attn = attn[:B]
    if return_logits:
        return out, attn
    return out


def _xavier_uniform(key, shape, gain):
    fan_in, fan_out = shape[0], shape[1]
    bound = gain * math.sqrt(6.0 / (fan_in + fan_out))
    return jax.random.uniform(key, shape, jnp.float32, -bound, bound)


def _reference(h, a, b, mask=None):
    e = jnp.matmul(jnp.tanh(jnp.matmul(h, a)), b)            # (B, L, 1)
    if mask is not None:
        mask_f = mask.astype(jnp.float32)
        full_mask = -1e30 * (1.0 - mask_f)
        batch_mask = (jnp.sum((mask_f == 0.0).astype(jnp.int32), -1) != 0
                      ).astype(jnp.float32)[:, None]
        e = e + (full_mask * batch_mask)[:, :, None]
    attn = jax.nn.softmax(e, axis=1)                          # (B, L, 1)
    return jnp.squeeze(jnp.matmul(jnp.swapaxes(attn, 1, 2), h), axis=1)


if __name__ == "__main__":
    # Small shapes: batch=2, seq=8, hidden=32, da=16
    B, L, D, Da = 2, 8, 32, 16
    key = jax.random.PRNGKey(0)
    k_h, k_a, k_b = jax.random.split(key, 3)

    h = jax.random.normal(k_h, (B, L, D), dtype=jnp.float32)
    a = _xavier_uniform(k_a, (D, Da), gain=1.414)
    b = _xavier_uniform(k_b, (Da, 1), gain=1.414)

    # mask=None path
    out = self_attentive_encoder(h, a, b)
    out = jax.block_until_ready(out)
    ref = _reference(h, a, b)
    assert out.shape == (B, D)
    assert jnp.allclose(out, ref, atol=1e-4, rtol=1e-4), "mismatch vs reference (no mask)"

    # masked path (polarity follows the PyTorch formula exactly)
    mask = jnp.array([[0, 0, 0, 1, 1, 1, 1, 1],
                      [1, 1, 1, 1, 1, 1, 1, 1]], dtype=jnp.float32)
    out_m, attn_m = self_attentive_encoder(h, a, b, mask=mask, return_logits=True)
    out_m = jax.block_until_ready(out_m)
    ref_m = _reference(h, a, b, mask=mask)
    assert out_m.shape == (B, D) and attn_m.shape == (B, L)
    assert jnp.allclose(out_m, ref_m, atol=1e-4, rtol=1e-4), "mismatch vs reference (mask)"

    print("KERNEL_OK")
</pallas_src>

<mosaic_0001>
module attributes {stable_mosaic.version = 11 : i64} {
  func.func @_unmasked_kernel(%arg0: i32, %arg1: memref<8x8x32xf32, #tpu.memory_space<vmem>>, %arg2: memref<32x16xf32, #tpu.memory_space<vmem>>, %arg3: memref<1x16xf32, #tpu.memory_space<vmem>>, %arg4: memref<8x32xf32, #tpu.memory_space<vmem>>, %arg5: memref<8x8xf32, #tpu.memory_space<vmem>>) attributes {dimension_semantics = [#tpu.dimension_semantics<parallel>], iteration_bounds = array<i64: 1>, scalar_prefetch = 0 : i64, scratch_operands = 0 : i64, tpu.core_type = #tpu.core_type<tc>, window_params = [{transform_indices = @transform_0, window_bounds = array<i64: 8, 8, 32>}, {pipeline_mode = #tpu.pipeline_mode<synchronous>, transform_indices = @transform_1, window_bounds = array<i64: 32, 16>}, {pipeline_mode = #tpu.pipeline_mode<synchronous>, transform_indices = @transform_2, window_bounds = array<i64: 1, 16>}, {transform_indices = @transform_3, window_bounds = array<i64: 8, 32>}, {transform_indices = @transform_4, window_bounds = array<i64: 8, 8>}]} {
    %c0 = arith.constant 0 : index
    %c0_0 = arith.constant 0 : index
    %c0_1 = arith.constant 0 : index
    %0 = vector.load %arg1[%c0, %c0_0, %c0_1] : memref<8x8x32xf32, #tpu.memory_space<vmem>>, vector<8x8x32xf32>
    %c0_2 = arith.constant 0 : index
    %c0_3 = arith.constant 0 : index
    %1 = vector.load %arg2[%c0_2, %c0_3] : memref<32x16xf32, #tpu.memory_space<vmem>>, vector<32x16xf32>
    %c0_4 = arith.constant 0 : index
    %c0_5 = arith.constant 0 : index
    %2 = vector.load %arg3[%c0_4, %c0_5] : memref<1x16xf32, #tpu.memory_space<vmem>>, vector<1x16xf32>
    %3 = vector.shape_cast %0 : vector<8x8x32xf32> to vector<64x32xf32>
    %cst = arith.constant dense<0.000000e+00> : vector<64x16xf32>
    %4 = tpu.matmul %3, %1, %cst {dimension_numbers = #tpu.dot_dimension_numbers<[1], [0], [0], [1], [0, 0, 1, 1], [], []>} : vector<64x32xf32>, vector<32x16xf32>, vector<64x16xf32> -> vector<64x16xf32>
    %5 = math.tanh %4 : vector<64x16xf32>
    %6 = vector.shape_cast %5 : vector<64x16xf32> to vector<8x8x16xf32>
    %7 = vector.shape_cast %2 : vector<1x16xf32> to vector<1x1x16xf32>
    %8 = vector.broadcast %7 : vector<1x1x16xf32> to vector<8x8x16xf32>
    %9 = arith.mulf %6, %8 : vector<8x8x16xf32>
    %cst_6 = arith.constant dense<0.000000e+00> : vector<8x8xf32>
    %10 = vector.multi_reduction <add>, %9, %cst_6 [2] : vector<8x8x16xf32> to vector<8x8xf32>
    %cst_7 = arith.constant dense<0xFF800000> : vector<8xf32>
    %11 = vector.multi_reduction <maximumf>, %10, %cst_7 [1] : vector<8x8xf32> to vector<8xf32>
    %12 = vector.shape_cast %11 : vector<8xf32> to vector<8x1xf32>
    %13 = vector.broadcast %12 : vector<8x1xf32> to vector<8x8xf32>
    %14 = arith.subf %10, %13 : vector<8x8xf32>
    %15 = math.exp %14 : vector<8x8xf32>
    %cst_8 = arith.constant dense<0.000000e+00> : vector<8xf32>
    %16 = vector.multi_reduction <add>, %15, %cst_8 [1] : vector<8x8xf32> to vector<8xf32>
    %17 = vector.shape_cast %16 : vector<8xf32> to vector<8x1xf32>
    %18 = vector.broadcast %17 : vector<8x1xf32> to vector<8x8xf32>
    %19 = arith.divf %15, %18 : vector<8x8xf32>
    %20 = vector.shape_cast %19 : vector<8x8xf32> to vector<8x8x1xf32>
    %21 = vector.broadcast %20 : vector<8x8x1xf32> to vector<8x8x32xf32>
    %22 = arith.mulf %0, %21 : vector<8x8x32xf32>
    %cst_9 = arith.constant dense<0.000000e+00> : vector<8x32xf32>
    %23 = vector.multi_reduction <add>, %22, %cst_9 [1] : vector<8x8x32xf32> to vector<8x32xf32>
    %c0_10 = arith.constant 0 : index
    %c0_11 = arith.constant 0 : index
    %24 = vector.load %arg4[%c0_10, %c0_11] : memref<8x32xf32, #tpu.memory_space<vmem>>, vector<8x32xf32>
    tpu.vector_store %arg4[%c0_10, %c0_11], %23 {strides = array<i32>} : memref<8x32xf32, #tpu.memory_space<vmem>>, vector<8x32xf32>,
    %c0_12 = arith.constant 0 : index
    %c0_13 = arith.constant 0 : index
    %25 = vector.load %arg5[%c0_12, %c0_13] : memref<8x8xf32, #tpu.memory_space<vmem>>, vector<8x8xf32>
    tpu.vector_store %arg5[%c0_12, %c0_13], %19 {strides = array<i32>} : memref<8x8xf32, #tpu.memory_space<vmem>>, vector<8x8xf32>,
    return
  }
  func.func @transform_0(%arg0: i32) -> (i32, i32, i32) {
    %c0_i32 = arith.constant 0 : i32
    %c0_i32_0 = arith.constant 0 : i32
    %c0_i32_1 = arith.constant 0 : i32
    return %arg0, %c0_i32, %c0_i32_0 : i32, i32, i32
  }
  func.func @transform_1(%arg0: i32) -> (i32, i32) {
    %c0_i32 = arith.constant 0 : i32
    %c0_i32_0 = arith.constant 0 : i32
    %c0_i32_1 = arith.constant 0 : i32
    return %c0_i32, %c0_i32_0 : i32, i32
  }
  func.func @transform_2(%arg0: i32) -> (i32, i32) {
    %c0_i32 = arith.constant 0 : i32
    %c0_i32_0 = arith.constant 0 : i32
    %c0_i32_1 = arith.constant 0 : i32
    return %c0_i32, %c0_i32_0 : i32, i32
  }
  func.func @transform_3(%arg0: i32) -> (i32, i32) {
    %c0_i32 = arith.constant 0 : i32
    %c0_i32_0 = arith.constant 0 : i32
    return %arg0, %c0_i32 : i32, i32
  }
  func.func @transform_4(%arg0: i32) -> (i32, i32) {
    %c0_i32 = arith.constant 0 : i32
    %c0_i32_0 = arith.constant 0 : i32
    return %arg0, %c0_i32 : i32, i32
  }
}

</mosaic_0001>

<llo_original>
// kernel: tpu_custom_call.1
$region0: #{tpu_custom_call.1}
  #allocation0 [shape = 'u32[]', space=smem, size = 0x4, offset = 0x4, fixed_abs, tag = 'smem constant byte address 0x4 - core index']
  #allocation1 [shape = 'u32[72,128]{1,0:T(1,128)}', space=vmem, size = 0x9000, scoped, tag = 'internal scratch']
  %s0 = inlined_call_operand.hbm [shape: f32[8,8,32], index: 0, kind: input, shape index: {}]
  %s1 = inlined_call_operand.vmem [shape: f32[32,16], index: 1, kind: input, shape index: {}]
  %s2 = inlined_call_operand.vmem [shape: f32[1,16], index: 2, kind: input, shape index: {}]
  %s3 = inlined_call_operand.hbm [shape: f32[8,32], index: 3, kind: output, shape index: {0}]
  %s4 = inlined_call_operand.hbm [shape: f32[8,8], index: 4, kind: output, shape index: {1}]
  %5 = xla_tuple %s3, %s4
  %s6 = sld [smem:[#allocation0]]
  $region34: #{tpu_custom_call.1} parent=0
    _
  %s8 = ssub.s32 1, %s6
  %s9 = scalar_select 0, %s8, %s6
  $region1: #{tpu_custom_call.1} parent=0
    #allocation2 [shape = 'u8[32768]{0}', space=vmem, size = 0x8000, scoped, tag = 'input window, operand 0, single buffered']
    #allocation3 [shape = 's32[1]{0}', space=sflag, size = 0x4, scoped, tag = 'scoped memory for tpu_custom_call.1']
    #allocation4 [shape = 's32[1]{0}', space=sflag, size = 0x4, scoped, tag = 'scoped memory for tpu_custom_call.1']
    #allocation5 [shape = 'u8[4096]{0}', space=vmem, size = 0x1000, scoped, tag = 'output window, operand 0, single buffered']
    #allocation6 [shape = 'u8[4096]{0}', space=vmem, size = 0x1000, scoped, tag = 'output window, operand 1, single buffered']
    #allocation7 [shape = 's32[1]{0}', space=sflag, size = 0x4, scoped, tag = 'scoped memory for tpu_custom_call.1']
    %10 = vsyncpa [#allocation3], 0
    %11 = vsyncpa [#allocation4], 0
    %12 = vsyncpa [#allocation7], 0
    // Predicated region
    $region2: #{tpu_custom_call.1} parent=1 // pred_check
      _
    $region3: #{tpu_custom_call.1} parent=1 // pred_check_branch
      %14 = sbr.rel (0) target = $region5
    $region4: #{tpu_custom_call.1} parent=1 // pred_region
      %16 = vsyncadd [#allocation3], 0
      %s17 = sshll.u32 %s0, 4
      %s18 = int_to_ptr.hbm [resolvable:$true] %s17
      %s19 = sshll.u32 [#allocation2], 4
      %s20 = int_to_ptr.vmem [resolvable:$true] %s19
      %25 = dma.hbm_to_vmem [thread:$0]  %s18, 1024, %s20, [#allocation3], 128, 128, 8
    $region5: #{tpu_custom_call.1} parent=1 // pred_fallthru
      _
    // Predicated region
    $region6: #{tpu_custom_call.1} parent=1 // pred_check
      _
    $region7: #{tpu_custom_call.1} parent=1 // pred_check_branch
      %27 = sbr.rel (0) target = $region9
    $region8: #{tpu_custom_call.1} parent=1 // pred_region
      _
    $region9: #{tpu_custom_call.1} parent=1 // pred_fallthru
      _
    // Predicated region
    $region10: #{tpu_custom_call.1} parent=1 // pred_check
      _
    $region11: #{tpu_custom_call.1} parent=1 // pred_check_branch
      %29 = sbr.rel (0) target = $region13
    $region12: #{tpu_custom_call.1} parent=1 // pred_region
      _
    $region13: #{tpu_custom_call.1} parent=1 // pred_fallthru
      _
    // Predicated region
    $region14: #{tpu_custom_call.1} parent=1 // pred_check
      _
    $region15: #{tpu_custom_call.1} parent=1 // pred_check_branch
      %31 = sbr.rel (0) target = $region17
    $region16: #{tpu_custom_call.1} parent=1 // pred_region
      %33 = dma.done [#allocation3], 1024
    $region17: #{tpu_custom_call.1} parent=1 // pred_fallthru
      _
    %v34 = vld [vmem:[#allocation2] sm:$0xff]
    %v35 = vld [vmem:[#allocation2 + $0x8] sm:$0xff]
    %v36 = vld [vmem:[#allocation2 + $0x10] sm:$0xff]
    %v37 = vld [vmem:[#allocation2 + $0x18] sm:$0xff]
    %v38 = vld [vmem:[#allocation2 + $0x20] sm:$0xff]
    %v39 = vld [vmem:[#allocation2 + $0x28] sm:$0xff]
    %v40 = vld [vmem:[#allocation2 + $0x30] sm:$0xff]
    %v41 = vld [vmem:[#allocation2 + $0x38] sm:$0xff]
    %v42 = vld [vmem:[%s1] sm:$0xff]
    %v43 = vld [vmem:[%s1 + $0x8] sm:$0xff]
    %v44 = vld [vmem:[%s1 + $0x10] sm:$0xff]
    %v45 = vld [vmem:[%s1 + $0x18] sm:$0xff]
    %v46 = vld [vmem:[%s2] sm:$0x1]
    %vm47 = vcmask 261120
    %v49 = vsel %vm47, %v34, 0
    %v52 = vsel %vm47, %v35, 0
    %v55 = vsel %vm47, %v36, 0
    %v58 = vsel %vm47, %v37, 0
    %v61 = vsel %vm47, %v38, 0
    %v64 = vsel %vm47, %v39, 0
    %v67 = vsel %vm47, %v40, 0
    %v70 = vsel %vm47, %v41, 0
    %72 = vmatpush.msra.mxu0 0.0
    %73 = vmatpush.msra.mxu0 0.0
    %74 = vmatpush.msra.mxu0 0.0
    %75 = vmatpush.msra.mxu0 0.0
    %76 = vmatpush.msra.mxu0 0.0
    %77 = vmatpush.msra.mxu0 0.0
    %78 = vmatpush.msra.mxu0 0.0
    %79 = vmatpush.msra.mxu0 0.0
    %80 = vmatpush.msra.mxu0 0.0
    %81 = vmatpush.msra.mxu0 0.0
    %82 = vmatpush.msra.mxu0 0.0
    %83 = vmatpush.msra.mxu0 0.0
    %84 = vmatpush.msra.mxu0 %v45
    %85 = vmatpush.msra.mxu0 %v44
    %86 = vmatpush.msra.mxu0 %v43
    %87 = vmatpush.msra.mxu0 %v42
    %88 = vmatmul.f32.gmra.mxu0 %v49
    %v89 = vpop.f32.mrf.mxu0
    %v90 = vadd.f32 0.0, %v89
    %91 = vmatmul.f32.gmra.mxu0 %v52
    %v92 = vpop.f32.mrf.mxu0
    %v93 = vadd.f32 0.0, %v92
    %94 = vmatmul.f32.gmra.mxu0 %v55
    %v95 = vpop.f32.mrf.mxu0
    %v96 = vadd.f32 0.0, %v95
    %97 = vmatmul.f32.gmra.mxu0 %v58
    %v98 = vpop.f32.mrf.mxu0
    %v99 = vadd.f32 0.0, %v98
    %100 = vmatmul.f32.gmra.mxu0 %v61
    %v101 = vpop.f32.mrf.mxu0
    %v102 = vadd.f32 0.0, %v101
    %103 = vmatmul.f32.gmra.mxu0 %v64
    %v104 = vpop.f32.mrf.mxu0
    %v105 = vadd.f32 0.0, %v104
    %106 = vmatmul.f32.gmra.mxu0 %v67
    %v107 = vpop.f32.mrf.mxu0
    %v108 = vadd.f32 0.0, %v107
    %109 = vmatmul.f32.gmra.mxu0 %v70
    %v110 = vpop.f32.mrf.mxu0
    %v111 = vadd.f32 0.0, %v110
    %112 = vdwg.mxu0
    %v113 = vtanh.pop %v90
    %v114 = vtanh.pop %v93
    %v115 = vtanh.pop %v96
    %v116 = vtanh.pop %v99
    %v117 = vtanh.pop %v102
    %v118 = vtanh.pop %v105
    %v119 = vtanh.pop %v108
    %v120 = vtanh.pop %v111
    %v122 = vperm.slane %v46, 0
    %v124 = vmul.f32 %v113, %v122
    %v125 = vmul.f32 %v114, %v122
    %v126 = vmul.f32 %v115, %v122
    %v127 = vmul.f32 %v116, %v122
    %v128 = vmul.f32 %v117, %v122
    %v129 = vmul.f32 %v118, %v122
    %v130 = vmul.f32 %v119, %v122
    %v131 = vmul.f32 %v120, %v122
    %vm132 = vcmask 130048
    %v133 = vsel %vm132, %v124, 0.0
    %134 = vadd.xlane.f32.xlu0 %v133
    %v135 = vpop.xlane.xlu0 %134
    %v136 = vsel %vm132, %v125, 0.0
    %137 = vadd.xlane.f32.xlu0 %v136
    %v138 = vpop.xlane.xlu0 %137
    %v139 = vsel %vm132, %v126, 0.0
    %140 = vadd.xlane.f32.xlu0 %v139
    %v141 = vpop.xlane.xlu0 %140
    %v142 = vsel %vm132, %v127, 0.0
    %143 = vadd.xlane.f32.xlu0 %v142
    %v144 = vpop.xlane.xlu0 %143
    %v145 = vsel %vm132, %v128, 0.0
    %146 = vadd.xlane.f32.xlu0 %v145
    %v147 = vpop.xlane.xlu0 %146
    %v148 = vsel %vm132, %v129, 0.0
    %149 = vadd.xlane.f32.xlu0 %v148
    %v150 = vpop.xlane.xlu0 %149
    %v151 = vsel %vm132, %v130, 0.0
    %152 = vadd.xlane.f32.xlu0 %v151
    %v153 = vpop.xlane.xlu0 %152
    %v154 = vsel %vm132, %v131, 0.0
    %155 = vadd.xlane.f32.xlu0 %v154
    %v156 = vpop.xlane.xlu0 %155
    %v165 = vlaneseq
    %v166 = vand.u32 %v165, 127
    %v167 = vperm.slane %v135, %v166
    %v168 = vperm.slane %v138, %v166
    %v169 = vperm.slane %v141, %v166
    %v170 = vperm.slane %v144, %v166
    %v171 = vperm.slane %v147, %v166
    %v172 = vperm.slane %v150, %v166
    %v173 = vperm.slane %v153, %v166
    %v174 = vperm.slane %v156, %v166
    %vm175 = vcmask 1041409
    %v176 = vsel %vm175, %v168, %v167
    %vm177 = vcmask 1042434
    %v178 = vsel %vm177, %v169, %v176
    %vm179 = vcmask 1043459
    %v180 = vsel %vm179, %v170, %v178
    %vm181 = vcmask 1044484
    %v182 = vsel %vm181, %v171, %v180
    %vm183 = vcmask 1045509
    %v184 = vsel %vm183, %v172, %v182
    %vm185 = vcmask 1046534
    %v186 = vsel %vm185, %v173, %v184
    %vm187 = vcmask 1047559
    %v188 = vsel %vm187, %v174, %v186
    %vm190 = vcmask 64512
    %v191 = vsel %vm190, %v188, -inf
    %192 = vmax.xlane.f32.xlu0 %v191
    %v193 = vpop.xlane.xlu0 %192
    %v195 = vperm.slane %v193, 0
    %v196 = vperm.slane %v193, 1
    %v197 = vperm.slane %v193, 2
    %v198 = vperm.slane %v193, 3
    %v199 = vperm.slane %v193, 4
    %v200 = vperm.slane %v193, 5
    %v201 = vperm.slane %v193, 6
    %v202 = vperm.slane %v193, 7
    %v211 = vsub.f32 %v135, %v195
    %v212 = vsub.f32 %v138, %v196
    %v213 = vsub.f32 %v141, %v197
    %v214 = vsub.f32 %v144, %v198
    %v215 = vsub.f32 %v147, %v199
    %v216 = vsub.f32 %v150, %v200
    %v217 = vsub.f32 %v153, %v201
    %v218 = vsub.f32 %v156, %v202
    %v219 = vmul.f32 %v211, 1.442695
    %v220 = vpow.pop %v219
    %v221 = vmul.f32 %v212, 1.442695
    %v222 = vpow.pop %v221
    %v223 = vmul.f32 %v213, 1.442695
    %v224 = vpow.pop %v223
    %v225 = vmul.f32 %v214, 1.442695
    %v226 = vpow.pop %v225
    %v227 = vmul.f32 %v215, 1.442695
    %v228 = vpow.pop %v227
    %v229 = vmul.f32 %v216, 1.442695
    %v230 = vpow.pop %v229
    %v231 = vmul.f32 %v217, 1.442695
    %v232 = vpow.pop %v231
    %v233 = vmul.f32 %v218, 1.442695
    %v234 = vpow.pop %v233
    %243 = vset.pattern.permute.xlu0 0
    %244 = vperm.xlu0 %243, %v220
    %v245 = vpop.permute.xlu0 %244
    %246 = vset.pattern.permute.xlu0 0
    %247 = vperm.xlu0 %246, %v222
    %v248 = vpop.permute.xlu0 %247
    %249 = vset.pattern.permute.xlu0 0
    %250 = vperm.xlu0 %249, %v224
    %v251 = vpop.permute.xlu0 %250
    %252 = vset.pattern.permute.xlu0 0
    %253 = vperm.xlu0 %252, %v226
    %v254 = vpop.permute.xlu0 %253
    %255 = vset.pattern.permute.xlu0 0
    %256 = vperm.xlu0 %255, %v228
    %v257 = vpop.permute.xlu0 %256
    %258 = vset.pattern.permute.xlu0 0
    %259 = vperm.xlu0 %258, %v230
    %v260 = vpop.permute.xlu0 %259
    %261 = vset.pattern.permute.xlu0 0
    %262 = vperm.xlu0 %261, %v232
    %v263 = vpop.permute.xlu0 %262
    %264 = vset.pattern.permute.xlu0 0
    %265 = vperm.xlu0 %264, %v234
    %v266 = vpop.permute.xlu0 %265
    %v267 = vperm.slane %v245, %v166
    %v268 = vperm.slane %v248, %v166
    %v269 = vperm.slane %v251, %v166
    %v270 = vperm.slane %v254, %v166
    %v271 = vperm.slane %v257, %v166
    %v272 = vperm.slane %v260, %v166
    %v273 = vperm.slane %v263, %v166
    %v274 = vperm.slane %v266, %v166
    %v275 = vsel %vm175, %v268, %v267
    %v276 = vsel %vm177, %v269, %v275
    %v277 = vsel %vm179, %v270, %v276
    %v278 = vsel %vm181, %v271, %v277
    %v279 = vsel %vm183, %v272, %v278
    %v280 = vsel %vm185, %v273, %v279
    %v281 = vsel %vm187, %v274, %v280
    %v283 = vsel %vm190, %v281, 0.0
    %284 = vadd.xlane.f32.xlu0 %v283
    %v285 = vpop.xlane.xlu0 %284
    %v287 = vperm.slane %v285, 0
    %v288 = vperm.slane %v285, 1
    %v289 = vperm.slane %v285, 2
    %v290 = vperm.slane %v285, 3
    %v291 = vperm.slane %v285, 4
    %v292 = vperm.slane %v285, 5
    %v293 = vperm.slane %v285, 6
    %v294 = vperm.slane %v285, 7
    %v303 = vrcp.pop %v287
    %v304 = vmul.f32 %v287, %v303
    %v305 = vsub.f32 1.0, %v304
    %v306 = vmul.f32 %v303, %v305
    %v307 = vadd.f32 %v303, %v306
    %vm308 = vweird.f32 %v287
    %vm309 = vweird.f32 %v303
    %vm310 = vmor %vm308, %vm309
    %v311 = vsel %vm310, %v303, %v307
    %v312 = vand.u32 2147483647, %v287
    %vm313 = vcmp.eq.f32.partialorder %v312, 8.507059e+37
    %v314 = vand.u32 %v287, 2147483648
    %v315 = vor.u32 1.1754944e-38, %v314
    %v316 = vsel %vm313, %v315, %v311
    %v317 = vmul.f32 %v220, %v316
    %v318 = vrcp.pop %v288
    %v319 = vmul.f32 %v288, %v318
    %v320 = vsub.f32 1.0, %v319
    %v321 = vmul.f32 %v318, %v320
    %v322 = vadd.f32 %v318, %v321
    %vm323 = vweird.f32 %v288
    %vm324 = vweird.f32 %v318
    %vm325 = vmor %vm323, %vm324
    %v326 = vsel %vm325, %v318, %v322
    %v327 = vand.u32 2147483647, %v288
    %vm328 = vcmp.eq.f32.partialorder %v327, 8.507059e+37
    %v329 = vand.u32 %v288, 2147483648
    %v330 = vor.u32 1.1754944e-38, %v329
    %v331 = vsel %vm328, %v330, %v326
    %v332 = vmul.f32 %v222, %v331
    %v333 = vrcp.pop %v289
    %v334 = vmul.f32 %v289, %v333
    %v335 = vsub.f32 1.0, %v334
    %v336 = vmul.f32 %v333, %v335
    %v337 = vadd.f32 %v333, %v336
    %vm338 = vweird.f32 %v289
    %vm339 = vweird.f32 %v333
    %vm340 = vmor %vm338, %vm339
    %v341 = vsel %vm340, %v333, %v337
    %v342 = vand.u32 2147483647, %v289
    %vm343 = vcmp.eq.f32.partialorder %v342, 8.507059e+37
    %v344 = vand.u32 %v289, 2147483648
    %v345 = vor.u32 1.1754944e-38, %v344
    %v346 = vsel %vm343, %v345, %v341
    %v347 = vmul.f32 %v224, %v346
    %v348 = vrcp.pop %v290
    %v349 = vmul.f32 %v290, %v348
    %v350 = vsub.f32 1.0, %v349
    %v351 = vmul.f32 %v348, %v350
    %v352 = vadd.f32 %v348, %v351
    %vm353 = vweird.f32 %v290
    %vm354 = vweird.f32 %v348
    %vm355 = vmor %vm353, %vm354
    %v356 = vsel %vm355, %v348, %v352
    %v357 = vand.u32 2147483647, %v290
    %vm358 = vcmp.eq.f32.partialorder %v357, 8.507059e+37
    %v359 = vand.u32 %v290, 2147483648
    %v360 = vor.u32 1.1754944e-38, %v359
    %v361 = vsel %vm358, %v360, %v356
    %v362 = vmul.f32 %v226, %v361
    %v363 = vrcp.pop %v291
    %v364 = vmul.f32 %v291, %v363
    %v365 = vsub.f32 1.0, %v364
    %v366 = vmul.f32 %v363, %v365
    %v367 = vadd.f32 %v363, %v366
    %vm368 = vweird.f32 %v291
    %vm369 = vweird.f32 %v363
    %vm370 = vmor %vm368, %vm369
    %v371 = vsel %vm370, %v363, %v367
    %v372 = vand.u32 2147483647, %v291
    %vm373 = vcmp.eq.f32.partialorder %v372, 8.507059e+37
    %v374 = vand.u32 %v291, 2147483648
    %v375 = vor.u32 1.1754944e-38, %v374
    %v376 = vsel %vm373, %v375, %v371
    %v377 = vmul.f32 %v228, %v376
    %v378 = vrcp.pop %v292
    %v379 = vmul.f32 %v292, %v378
    %v380 = vsub.f32 1.0, %v379
    %v381 = vmul.f32 %v378, %v380
    %v382 = vadd.f32 %v378, %v381
    %vm383 = vweird.f32 %v292
    %vm384 = vweird.f32 %v378
    %vm385 = vmor %vm383, %vm384
    %v386 = vsel %vm385, %v378, %v382
    %v387 = vand.u32 2147483647, %v292
    %vm388 = vcmp.eq.f32.partialorder %v387, 8.507059e+37
    %v389 = vand.u32 %v292, 2147483648
    %v390 = vor.u32 1.1754944e-38, %v389
    %v391 = vsel %vm388, %v390, %v386
    %v392 = vmul.f32 %v230, %v391
    %v393 = vrcp.pop %v293
    %v394 = vmul.f32 %v293, %v393
    %v395 = vsub.f32 1.0, %v394
    %v396 = vmul.f32 %v393, %v395
    %v397 = vadd.f32 %v393, %v396
    %vm398 = vweird.f32 %v293
    %vm399 = vweird.f32 %v393
    %vm400 = vmor %vm398, %vm399
    %v401 = vsel %vm400, %v393, %v397
    %v402 = vand.u32 2147483647, %v293
    %vm403 = vcmp.eq.f32.partialorder %v402, 8.507059e+37
    %v404 = vand.u32 %v293, 2147483648
    %v405 = vor.u32 1.1754944e-38, %v404
    %v406 = vsel %vm403, %v405, %v401
    %v407 = vmul.f32 %v232, %v406
    %v408 = vrcp.pop %v294
    %v409 = vmul.f32 %v294, %v408
    %v410 = vsub.f32 1.0, %v409
    %v411 = vmul.f32 %v408, %v410
    %v412 = vadd.f32 %v408, %v411
    %vm413 = vweird.f32 %v294
    %vm414 = vweird.f32 %v408
    %vm415 = vmor %vm413, %vm414
    %v416 = vsel %vm415, %v408, %v412
    %v417 = vand.u32 2147483647, %v294
    %vm418 = vcmp.eq.f32.partialorder %v417, 8.507059e+37
    %v419 = vand.u32 %v294, 2147483648
    %v420 = vor.u32 1.1754944e-38, %v419
    %v421 = vsel %vm418, %v420, %v416
    %v422 = vmul.f32 %v234, %v421
    %424 = vset.pattern.permute.xlu0 0
    %425 = vperm.xlu0 %424, %v317
    %v426 = vpop.permute.xlu0 %425
    %429 = vset.pattern.permute.xlu0 0
    %430 = vperm.xlu0 %429, %v332
    %v431 = vpop.permute.xlu0 %430
    %434 = vset.pattern.permute.xlu0 0
    %435 = vperm.xlu0 %434, %v347
    %v436 = vpop.permute.xlu0 %435
    %439 = vset.pattern.permute.xlu0 0
    %440 = vperm.xlu0 %439, %v362
    %v441 = vpop.permute.xlu0 %440
    %444 = vset.pattern.permute.xlu0 0
    %445 = vperm.xlu0 %444, %v377
    %v446 = vpop.permute.xlu0 %445
    %449 = vset.pattern.permute.xlu0 0
    %450 = vperm.xlu0 %449, %v392
    %v451 = vpop.permute.xlu0 %450
    %454 = vset.pattern.permute.xlu0 0
    %455 = vperm.xlu0 %454, %v407
    %v456 = vpop.permute.xlu0 %455
    %459 = vset.pattern.permute.xlu0 0
    %460 = vperm.xlu0 %459, %v422
    %v461 = vpop.permute.xlu0 %460
    %v463 = vmul.f32 %v34, %v426
    %v464 = vmul.f32 %v35, %v431
    %v465 = vmul.f32 %v36, %v436
    %v466 = vmul.f32 %v37, %v441
    %v467 = vmul.f32 %v38, %v446
    %v468 = vmul.f32 %v39, %v451
    %v469 = vmul.f32 %v40, %v456
    %v470 = vmul.f32 %v41, %v461
    %v471 = vsel %vm47, %v463, 0.0
    %v472 = vrot.slane %v471, 4
    %v473 = vadd.f32 %v471, %v472
    %v474 = vrot.slane %v473, 2
    %v475 = vadd.f32 %v473, %v474
    %v476 = vrot.slane %v475, 1
    %v477 = vadd.f32 %v475, %v476
    %v478 = vsel %vm47, %v464, 0.0
    %v479 = vrot.slane %v478, 4
    %v480 = vadd.f32 %v478, %v479
    %v481 = vrot.slane %v480, 2
    %v482 = vadd.f32 %v480, %v481
    %v483 = vrot.slane %v482, 1
    %v484 = vadd.f32 %v482, %v483
    %v485 = vsel %vm47, %v465, 0.0
    %v486 = vrot.slane %v485, 4
    %v487 = vadd.f32 %v485, %v486
    %v488 = vrot.slane %v487, 2
    %v489 = vadd.f32 %v487, %v488
    %v490 = vrot.slane %v489, 1
    %v491 = vadd.f32 %v489, %v490
    %v492 = vsel %vm47, %v466, 0.0
    %v493 = vrot.slane %v492, 4
    %v494 = vadd.f32 %v492, %v493
    %v495 = vrot.slane %v494, 2
    %v496 = vadd.f32 %v494, %v495
    %v497 = vrot.slane %v496, 1
    %v498 = vadd.f32 %v496, %v497
    %v499 = vsel %vm47, %v467, 0.0
    %v500 = vrot.slane %v499, 4
    %v501 = vadd.f32 %v499, %v500
    %v502 = vrot.slane %v501, 2
    %v503 = vadd.f32 %v501, %v502
    %v504 = vrot.slane %v503, 1
    %v505 = vadd.f32 %v503, %v504
    %v506 = vsel %vm47, %v468, 0.0
    %v507 = vrot.slane %v506, 4
    %v508 = vadd.f32 %v506, %v507
    %v509 = vrot.slane %v508, 2
    %v510 = vadd.f32 %v508, %v509
    %v511 = vrot.slane %v510, 1
    %v512 = vadd.f32 %v510, %v511
    %v513 = vsel %vm47, %v469, 0.0
    %v514 = vrot.slane %v513, 4
    %v515 = vadd.f32 %v513, %v514
    %v516 = vrot.slane %v515, 2
    %v517 = vadd.f32 %v515, %v516
    %v518 = vrot.slane %v517, 1
    %v519 = vadd.f32 %v517, %v518
    %v520 = vsel %vm47, %v470, 0.0
    %v521 = vrot.slane %v520, 4
    %v522 = vadd.f32 %v520, %v521
    %v523 = vrot.slane %v522, 2
    %v524 = vadd.f32 %v522, %v523
    %v525 = vrot.slane %v524, 1
    %v526 = vadd.f32 %v524, %v525
    %v535 = vsel %vm175, %v484, %v477
    %v536 = vsel %vm177, %v491, %v535
    %v537 = vsel %vm179, %v498, %v536
    %v538 = vsel %vm181, %v505, %v537
    %v539 = vsel %vm183, %v512, %v538
    %v540 = vsel %vm185, %v519, %v539
    %v541 = vsel %vm187, %v526, %v540
    %543 = vst.msk [vmem:[#allocation5] sm:$0xff] %vm47, %v541
    %v544 = vperm.slane %v426, %v166
    %v545 = vperm.slane %v431, %v166
    %v546 = vperm.slane %v436, %v166
    %v547 = vperm.slane %v441, %v166
    %v548 = vperm.slane %v446, %v166
    %v549 = vperm.slane %v451, %v166
    %v550 = vperm.slane %v456, %v166
    %v551 = vperm.slane %v461, %v166
    %v552 = vsel %vm175, %v545, %v544
    %v553 = vsel %vm177, %v546, %v552
    %v554 = vsel %vm179, %v547, %v553
    %v555 = vsel %vm181, %v548, %v554
    %v556 = vsel %vm183, %v549, %v555
    %v557 = vsel %vm185, %v550, %v556
    %v558 = vsel %vm187, %v551, %v557
    %560 = vst.msk [vmem:[#allocation6] sm:$0xff] %vm190, %v558
    // Predicated region
    $region18: #{tpu_custom_call.1} parent=1 // pred_check
      _
    $region19: #{tpu_custom_call.1} parent=1 // pred_check_branch
      %562 = sbr.rel (0) target = $region21
    $region20: #{tpu_custom_call.1} parent=1 // pred_region
      %564 = vsyncadd [#allocation4], 0
      %s566 = sshll.u32 [#allocation5], 4
      %s567 = int_to_ptr.vmem [resolvable:$true] %s566
      %s568 = sshll.u32 %s3, 4
      %s569 = int_to_ptr.hbm [resolvable:$true] %s568
      %571 = dma.vmem_to_hbm [thread:$0]  %s567, 128, %s569, [#allocation4]
    $region21: #{tpu_custom_call.1} parent=1 // pred_fallthru
      _
    // Predicated region
    $region22: #{tpu_custom_call.1} parent=1 // pred_check
      _
    $region23: #{tpu_custom_call.1} parent=1 // pred_check_branch
      %573 = sbr.rel (0) target = $region25
    $region24: #{tpu_custom_call.1} parent=1 // pred_region
      %575 = vsyncadd [#allocation7], 0
      %s577 = sshll.u32 [#allocation6], 4
      %s578 = int_to_ptr.vmem [resolvable:$true] %s577
      %s579 = sshll.u32 %s4, 4
      %s580 = int_to_ptr.hbm [resolvable:$true] %s579
      %582 = dma.vmem_to_hbm [thread:$0]  %s578, 128, %s580, [#allocation7]
    $region25: #{tpu_custom_call.1} parent=1 // pred_fallthru
      _
    // Predicated region
    $region26: #{tpu_custom_call.1} parent=1 // pred_check
      _
    $region27: #{tpu_custom_call.1} parent=1 // pred_check_branch
      %584 = sbr.rel (0) target = $region29
    $region28: #{tpu_custom_call.1} parent=1 // pred_region
      %586 = dma.done [#allocation4], 128
    $region29: #{tpu_custom_call.1} parent=1 // pred_fallthru
      _
    // Predicated region
    $region30: #{tpu_custom_call.1} parent=1 // pred_check
      _
    $region31: #{tpu_custom_call.1} parent=1 // pred_check_branch
      %588 = sbr.rel (0) target = $region33
    $region32: #{tpu_custom_call.1} parent=1 // pred_region
      %590 = dma.done [#allocation7], 128
    $region33: #{tpu_custom_call.1} parent=1 // pred_fallthru
      _
    %591 = vsyncpa [#allocation3], 1
    %592 = vsyncpa [#allocation4], 1
    %593 = vsyncpa [#allocation7], 1

</llo_original>
